<compile_context>
chip_gen: v6e
topology: v6e:2x2x1
jax: 0.10.0
libtpu: 0.0.40
codegen_flags: <defaults>
</compile_context>

<pallas_src>
import functools

import jax
import jax.numpy as jnp
from jax.experimental import pallas as pl
from jax.experimental.pallas import tpu as pltpu


def _conv_layer_kernel(x_ref, res_ref, mask_ref, w_ref, b_ref, g_ref, beta_ref,
                       o_ref, acc_ref, *, eps: float, kernel_size: int):
    """One batch element per grid step.

    x_ref / res_ref : (1, S, H)  activations, caller dtype (bf16 or f32)
    mask_ref        : (1, S, 1)  f32 0/1
    w_ref           : (K, H, H)  per-tap weights, w_ref[k, i, o] = conv_w[o, i, k]
    b_ref/g_ref/beta_ref : (1, H)
    o_ref           : (1, S, H)
    acc_ref         : (S, H)     f32 VMEM scratch accumulator
    """
    K = kernel_size
    pad = (K - 1) // 2
    S, H = acc_ref.shape

    x = x_ref[0]  # (S, H), loaded once, stays in the caller's dtype for the MXU

    # ---- Conv1d(H, H, K, padding=pad) as K per-tap matmuls -----------------
    # Centre tap (offset 0) covers every output row: use it to initialise the
    # accumulator directly (no separate zeros / bias-broadcast init pass).
    acc_ref[...] = jnp.dot(x, w_ref[pad], preferred_element_type=jnp.float32)
    for k in range(K):                         # static unroll, K is tiny
        if k == pad:
            continue
        d = k - pad                            # sequence offset of this tap
        lo = max(0, -d)                        # compile-time bounds clipped
        hi = min(S, S - d)                     # to [0, S)  (zero padding)
        if lo >= hi:
            continue
        y_k = jnp.dot(x, w_ref[k], preferred_element_type=jnp.float32)  # (S,H) f32
        acc_ref[lo:hi, :] = acc_ref[lo:hi, :] + y_k[lo + d:hi + d, :]

    # Bias added once after the matmuls (single fused broadcast-add).
    conv = acc_ref[...] + b_ref[...].astype(jnp.float32)

    # masked_fill in the reference is a discarded (non in-place) result -> no-op.
    # dropout is identity in eval mode.
    out = jnp.tanh(conv)

    # residual add + LayerNorm over the hidden dim (f32 epilogue math).
    ln_in = res_ref[0].astype(jnp.float32) + out
    mean = jnp.mean(ln_in, axis=-1, keepdims=True)
    cent = ln_in - mean
    var = jnp.mean(cent * cent, axis=-1, keepdims=True)
    inv = jax.lax.rsqrt(var + eps)
    normed = cent * inv * g_ref[...].astype(jnp.float32) \
        + beta_ref[...].astype(jnp.float32)

    # final mask multiply (input_mask.unsqueeze(2) * output)
    o_ref[0] = (normed * mask_ref[0].astype(jnp.float32)).astype(o_ref.dtype)


def conv_layer_forward(hidden_states, residual_states, input_mask,
                       conv_weight, conv_bias, ln_gamma, ln_beta,
                       *, eps=1e-7):
    """hidden_states / residual_states: (B, S, H) -- bf16 recommended, f32 ok.
       input_mask: (B, S)  (0/1)
       conv_weight: (H_out, H_in, K) -- PyTorch Conv1d layout
       conv_bias / ln_gamma / ln_beta: (H,)
    """
    B, S, H = hidden_states.shape
    K = conv_weight.shape[-1]

    # Per-tap right-multiply matrices, kept in the caller's dtype (no f32
    # upcast in HBM/VMEM: bf16 operands halve DMA traffic, MXU accumulates f32).
    w_t = jnp.transpose(conv_weight, (2, 1, 0))        # (K, H_in, H_out)
    bias2d = conv_bias.reshape(1, H)
    gamma2d = ln_gamma.reshape(1, H)
    beta2d = ln_beta.reshape(1, H)
    mask3d = input_mask.reshape(B, S, 1).astype(jnp.float32)
    # TODO(synk): feed the mask as a lane-dense (B, S) block instead of
    # (B, S, 1); skipped because the in-kernel relayout costs about what the
    # 1-lane load it avoids costs at these sizes.

    act_bytes = jnp.dtype(hidden_states.dtype).itemsize
    par_bytes = jnp.dtype(conv_weight.dtype).itemsize

    # Explicit VMEM budget: double-buffered activation / weight blocks plus the
    # f32 accumulator scratch, with 2x headroom (kept well under physical VMEM).
    block_bytes = (2 * 2 * S * H * act_bytes                 # hidden + residual
                   + 2 * S * H * act_bytes                   # output
                   + 2 * S * 4                               # mask
                   + 2 * (K * H * H + 3 * H) * par_bytes)    # weights + vectors
    scratch_bytes = S * H * 4
    vmem_limit = int(min(96 * 2**20,
                         max(32 * 2**20, 2 * (block_bytes + scratch_bytes))))
    # TODO(synk): for very long S / large H, tile the sequence with a halo and
    # single-buffer the (K,H,H) weight slab so the working set fits v7x's
    # 64 MiB VMEM and both v7x TensorCores get work when B == 1.

    cost = pl.CostEstimate(
        flops=int(2 * B * S * H * H * K + 10 * B * S * H),
        transcendentals=int(B * S * H + B * S),
        bytes_accessed=int(3 * B * S * H * act_bytes + B * S * 4
                           + (K * H * H + 3 * H) * par_bytes))

    kernel = functools.partial(_conv_layer_kernel, eps=float(eps),
                               kernel_size=int(K))

    return pl.pallas_call(
        kernel,
        out_shape=jax.ShapeDtypeStruct((B, S, H), hidden_states.dtype),
        grid_spec=pltpu.PrefetchScalarGridSpec(
            num_scalar_prefetch=0,
            grid=(B,),
            in_specs=[
                pl.BlockSpec((1, S, H), lambda b: (b, 0, 0)),   # hidden_states
                pl.BlockSpec((1, S, H), lambda b: (b, 0, 0)),   # residual_states
                pl.BlockSpec((1, S, 1), lambda b: (b, 0, 0)),   # input_mask
                pl.BlockSpec((K, H, H), lambda b: (0, 0, 0)),   # conv weight taps
                pl.BlockSpec((1, H), lambda b: (0, 0)),         # conv bias
                pl.BlockSpec((1, H), lambda b: (0, 0)),         # LN gamma
                pl.BlockSpec((1, H), lambda b: (0, 0)),         # LN beta
            ],
            out_specs=pl.BlockSpec((1, S, H), lambda b: (b, 0, 0)),
            scratch_shapes=[pltpu.VMEM((S, H), jnp.float32)],
        ),
        compiler_params=pltpu.CompilerParams(
            dimension_semantics=("parallel",),
            vmem_limit_bytes=vmem_limit),
        cost_estimate=cost,
    )(hidden_states, residual_states, mask3d, w_t, bias2d, gamma2d, beta2d)


def _reference_forward(x, res, mask, w, b, gamma, beta, eps):
    """Pure-JAX reference reproducing the PyTorch forward (eval mode)."""
    B, S, H = x.shape
    K = w.shape[-1]
    pad = (K - 1) // 2
    xp = jnp.pad(x, ((0, 0), (pad, pad), (0, 0)))
    conv = b
    for k in range(K):
        conv = conv + jnp.einsum('bsi,oi->bso', xp[:, k:k + S, :], w[:, :, k])
    out = jnp.tanh(conv)                      # masked_fill no-op, dropout identity
    ln_in = res + out
    mean = ln_in.mean(-1, keepdims=True)
    var = ((ln_in - mean) ** 2).mean(-1, keepdims=True)
    normed = (ln_in - mean) / jnp.sqrt(var + eps) * gamma + beta
    return normed * mask[..., None].astype(normed.dtype)


if __name__ == "__main__":
    # Small config: hidden_size=32, conv_kernel_size=3, layer_norm_eps=1e-7
    B, S, H, K = 2, 8, 32, 3
    eps = 1e-7

    key = jax.random.PRNGKey(0)
    k1, k2, k3, k4 = jax.random.split(key, 4)

    hidden_states = jax.random.normal(k1, (B, S, H), dtype=jnp.float32)
    residual_states = jax.random.normal(k2, (B, S, H), dtype=jnp.float32)
    input_mask = jnp.concatenate(
        [jnp.ones((B, S - 2), jnp.int32), jnp.zeros((B, 2), jnp.int32)], axis=1)

    conv_weight = 0.1 * jax.random.normal(k3, (H, H, K), dtype=jnp.float32)
    conv_bias = 0.1 * jax.random.normal(k4, (H,), dtype=jnp.float32)
    ln_gamma = jnp.ones((H,), jnp.float32)
    ln_beta = jnp.zeros((H,), jnp.float32)

    # --- f32 operands: tight check against the pure-JAX reference -----------
    out = conv_layer_forward(hidden_states, residual_states, input_mask,
                             conv_weight, conv_bias, ln_gamma, ln_beta, eps=eps)
    out = jax.block_until_ready(out)
    ref = _reference_forward(hidden_states, residual_states, input_mask,
                             conv_weight, conv_bias, ln_gamma, ln_beta, eps)
    assert out.shape == (B, S, H)
    assert jnp.allclose(out, ref, atol=1e-4, rtol=1e-4), \
        f"f32 max diff {jnp.max(jnp.abs(out - ref))}"

    # --- bf16 operands (recommended production path): bf16 in HBM/VMEM and on
    #     the MXU, f32 accumulation + f32 epilogue inside the kernel ----------
    bf16 = lambda a: a.astype(jnp.bfloat16)
    out_bf16 = conv_layer_forward(
        bf16(hidden_states), bf16(residual_states), input_mask,
        bf16(conv_weight), bf16(conv_bias), bf16(ln_gamma), bf16(ln_beta),
        eps=eps)
    out_bf16 = jax.block_until_ready(out_bf16)
    ref_bf16 = _reference_forward(
        bf16(hidden_states).astype(jnp.float32),
        bf16(residual_states).astype(jnp.float32), input_mask,
        bf16(conv_weight).astype(jnp.float32),
        bf16(conv_bias).astype(jnp.float32),
        bf16(ln_gamma).astype(jnp.float32),
        bf16(ln_beta).astype(jnp.float32), eps)
    assert out_bf16.dtype == jnp.bfloat16
    bf16_diff = jnp.max(jnp.abs(out_bf16.astype(jnp.float32) - ref_bf16))
    assert bf16_diff < 5e-2, f"bf16 max diff {bf16_diff}"

    print("KERNEL_OK")
</pallas_src>

<mosaic_0001>
module attributes {stable_mosaic.version = 11 : i64} {
  func.func @_conv_layer_kernel(%arg0: i32, %arg1: memref<1x8x32xf32, #tpu.memory_space<vmem>>, %arg2: memref<1x8x32xf32, #tpu.memory_space<vmem>>, %arg3: memref<1x8x1xf32, #tpu.memory_space<vmem>>, %arg4: memref<3x32x32xf32, #tpu.memory_space<vmem>>, %arg5: memref<1x32xf32, #tpu.memory_space<vmem>>, %arg6: memref<1x32xf32, #tpu.memory_space<vmem>>, %arg7: memref<1x32xf32, #tpu.memory_space<vmem>>, %arg8: memref<1x8x32xf32, #tpu.memory_space<vmem>>, %arg9: memref<8x32xf32, #tpu.memory_space<vmem>>) attributes {dimension_semantics = [#tpu.dimension_semantics<parallel>], iteration_bounds = array<i64: 2>, scalar_prefetch = 0 : i64, scratch_operands = 1 : i64, tpu.core_type = #tpu.core_type<tc>, window_params = [{transform_indices = @transform_0, window_bounds = array<i64: 1, 8, 32>}, {transform_indices = @transform_1, window_bounds = array<i64: 1, 8, 32>}, {transform_indices = @transform_2, window_bounds = array<i64: 1, 8, 1>}, {pipeline_mode = #tpu.pipeline_mode<synchronous>, transform_indices = @transform_3, window_bounds = array<i64: 3, 32, 32>}, {pipeline_mode = #tpu.pipeline_mode<synchronous>, transform_indices = @transform_4, window_bounds = array<i64: 1, 32>}, {pipeline_mode = #tpu.pipeline_mode<synchronous>, transform_indices = @transform_5, window_bounds = array<i64: 1, 32>}, {pipeline_mode = #tpu.pipeline_mode<synchronous>, transform_indices = @transform_6, window_bounds = array<i64: 1, 32>}, {transform_indices = @transform_7, window_bounds = array<i64: 1, 8, 32>}]} {
    %c0 = arith.constant 0 : index
    %c0_0 = arith.constant 0 : index
    %c0_1 = arith.constant 0 : index
    %0 = vector.load %arg1[%c0, %c0_0, %c0_1] : memref<1x8x32xf32, #tpu.memory_space<vmem>>, vector<1x8x32xf32>
    %1 = vector.shape_cast %0 : vector<1x8x32xf32> to vector<8x32xf32>
    %c1 = arith.constant 1 : index
    %c0_2 = arith.constant 0 : index
    %c0_3 = arith.constant 0 : index
    %2 = vector.load %arg4[%c1, %c0_2, %c0_3] : memref<3x32x32xf32, #tpu.memory_space<vmem>>, vector<1x32x32xf32>
    %3 = vector.shape_cast %2 : vector<1x32x32xf32> to vector<32x32xf32>
    %cst = arith.constant dense<0.000000e+00> : vector<8x32xf32>
    %4 = tpu.matmul %1, %3, %cst {dimension_numbers = #tpu.dot_dimension_numbers<[1], [0], [0], [1], [0, 0, 1, 1], [], []>} : vector<8x32xf32>, vector<32x32xf32>, vector<8x32xf32> -> vector<8x32xf32>
    %c0_4 = arith.constant 0 : index
    %c0_5 = arith.constant 0 : index
    %5 = vector.load %arg9[%c0_4, %c0_5] : memref<8x32xf32, #tpu.memory_space<vmem>>, vector<8x32xf32>
    tpu.vector_store %arg9[%c0_4, %c0_5], %4 {strides = array<i32>} : memref<8x32xf32, #tpu.memory_space<vmem>>, vector<8x32xf32>,
    %c0_6 = arith.constant 0 : index
    %c0_7 = arith.constant 0 : index
    %c0_8 = arith.constant 0 : index
    %6 = vector.load %arg4[%c0_6, %c0_7, %c0_8] : memref<3x32x32xf32, #tpu.memory_space<vmem>>, vector<1x32x32xf32>
    %7 = vector.shape_cast %6 : vector<1x32x32xf32> to vector<32x32xf32>
    %cst_9 = arith.constant dense<0.000000e+00> : vector<8x32xf32>
    %8 = tpu.matmul %1, %7, %cst_9 {dimension_numbers = #tpu.dot_dimension_numbers<[1], [0], [0], [1], [0, 0, 1, 1], [], []>} : vector<8x32xf32>, vector<32x32xf32>, vector<8x32xf32> -> vector<8x32xf32>
    %c1_10 = arith.constant 1 : index
    %c0_11 = arith.constant 0 : index
    %9 = vector.load %arg9[%c1_10, %c0_11] : memref<8x32xf32, #tpu.memory_space<vmem>>, vector<7x32xf32>
    %10 = vector.extract_strided_slice %8 {offsets = [0, 0], sizes = [7, 32], strides = [1, 1]} : vector<8x32xf32> to vector<7x32xf32>
    %11 = arith.addf %9, %10 : vector<7x32xf32>
    %c1_12 = arith.constant 1 : index
    %c0_13 = arith.constant 0 : index
    %12 = vector.load %arg9[%c1_12, %c0_13] : memref<8x32xf32, #tpu.memory_space<vmem>>, vector<7x32xf32>
    tpu.vector_store %arg9[%c1_12, %c0_13], %11 {strides = array<i32>} : memref<8x32xf32, #tpu.memory_space<vmem>>, vector<7x32xf32>,
    %c2 = arith.constant 2 : index
    %c0_14 = arith.constant 0 : index
    %c0_15 = arith.constant 0 : index
    %13 = vector.load %arg4[%c2, %c0_14, %c0_15] : memref<3x32x32xf32, #tpu.memory_space<vmem>>, vector<1x32x32xf32>
    %14 = vector.shape_cast %13 : vector<1x32x32xf32> to vector<32x32xf32>
    %cst_16 = arith.constant dense<0.000000e+00> : vector<8x32xf32>
    %15 = tpu.matmul %1, %14, %cst_16 {dimension_numbers = #tpu.dot_dimension_numbers<[1], [0], [0], [1], [0, 0, 1, 1], [], []>} : vector<8x32xf32>, vector<32x32xf32>, vector<8x32xf32> -> vector<8x32xf32>
    %c0_17 = arith.constant 0 : index
    %c0_18 = arith.constant 0 : index
    %16 = vector.load %arg9[%c0_17, %c0_18] : memref<8x32xf32, #tpu.memory_space<vmem>>, vector<7x32xf32>
    %17 = vector.extract_strided_slice %15 {offsets = [1, 0], sizes = [7, 32], strides = [1, 1]} : vector<8x32xf32> to vector<7x32xf32>
    %18 = arith.addf %16, %17 : vector<7x32xf32>
    %c0_19 = arith.constant 0 : index
    %c0_20 = arith.constant 0 : index
    %19 = vector.load %arg9[%c0_19, %c0_20] : memref<8x32xf32, #tpu.memory_space<vmem>>, vector<7x32xf32>
    tpu.vector_store %arg9[%c0_19, %c0_20], %18 {strides = array<i32>} : memref<8x32xf32, #tpu.memory_space<vmem>>, vector<7x32xf32>,
    %c0_21 = arith.constant 0 : index
    %c0_22 = arith.constant 0 : index
    %20 = vector.load %arg9[%c0_21, %c0_22] : memref<8x32xf32, #tpu.memory_space<vmem>>, vector<8x32xf32>
    %c0_23 = arith.constant 0 : index
    %c0_24 = arith.constant 0 : index
    %21 = vector.load %arg5[%c0_23, %c0_24] : memref<1x32xf32, #tpu.memory_space<vmem>>, vector<1x32xf32>
    %22 = vector.broadcast %21 : vector<1x32xf32> to vector<8x32xf32>
    %23 = arith.addf %20, %22 : vector<8x32xf32>
    %24 = math.tanh %23 : vector<8x32xf32>
    %c0_25 = arith.constant 0 : index
    %c0_26 = arith.constant 0 : index
    %c0_27 = arith.constant 0 : index
    %25 = vector.load %arg2[%c0_25, %c0_26, %c0_27] : memref<1x8x32xf32, #tpu.memory_space<vmem>>, vector<1x8x32xf32>
    %26 = vector.shape_cast %25 : vector<1x8x32xf32> to vector<8x32xf32>
    %27 = arith.addf %26, %24 : vector<8x32xf32>
    %cst_28 = arith.constant dense<0.000000e+00> : vector<8xf32>
    %28 = vector.multi_reduction <add>, %27, %cst_28 [1] : vector<8x32xf32> to vector<8xf32>
    %29 = vector.shape_cast %28 : vector<8xf32> to vector<8x1xf32>
    %cst_29 = arith.constant 3.200000e+01 : f32
    %30 = vector.broadcast %cst_29 : f32 to vector<8x1xf32>
    %31 = arith.divf %29, %30 : vector<8x1xf32>
    %32 = vector.broadcast %31 : vector<8x1xf32> to vector<8x32xf32>
    %33 = arith.subf %27, %32 : vector<8x32xf32>
    %34 = arith.mulf %33, %33 : vector<8x32xf32>
    %cst_30 = arith.constant dense<0.000000e+00> : vector<8xf32>
    %35 = vector.multi_reduction <add>, %34, %cst_30 [1] : vector<8x32xf32> to vector<8xf32>
    %36 = vector.shape_cast %35 : vector<8xf32> to vector<8x1xf32>
    %cst_31 = arith.constant 3.200000e+01 : f32
    %37 = vector.broadcast %cst_31 : f32 to vector<8x1xf32>
    %38 = arith.divf %36, %37 : vector<8x1xf32>
    %cst_32 = arith.constant 1.000000e-07 : f32
    %39 = vector.broadcast %cst_32 : f32 to vector<8x1xf32>
    %40 = arith.addf %38, %39 : vector<8x1xf32>
    %41 = math.rsqrt %40 : vector<8x1xf32>
    %42 = vector.broadcast %41 : vector<8x1xf32> to vector<8x32xf32>
    %43 = arith.mulf %33, %42 : vector<8x32xf32>
    %c0_33 = arith.constant 0 : index
    %c0_34 = arith.constant 0 : index
    %44 = vector.load %arg6[%c0_33, %c0_34] : memref<1x32xf32, #tpu.memory_space<vmem>>, vector<1x32xf32>
    %45 = vector.broadcast %44 : vector<1x32xf32> to vector<8x32xf32>
    %46 = arith.mulf %43, %45 : vector<8x32xf32>
    %c0_35 = arith.constant 0 : index
    %c0_36 = arith.constant 0 : index
    %47 = vector.load %arg7[%c0_35, %c0_36] : memref<1x32xf32, #tpu.memory_space<vmem>>, vector<1x32xf32>
    %48 = vector.broadcast %47 : vector<1x32xf32> to vector<8x32xf32>
    %49 = arith.addf %46, %48 : vector<8x32xf32>
    %c0_37 = arith.constant 0 : index
    %c0_38 = arith.constant 0 : index
    %c0_39 = arith.constant 0 : index
    %50 = vector.load %arg3[%c0_37, %c0_38, %c0_39] : memref<1x8x1xf32, #tpu.memory_space<vmem>>, vector<1x8x1xf32>
    %51 = vector.shape_cast %50 : vector<1x8x1xf32> to vector<8x1xf32>
    %52 = vector.broadcast %51 : vector<8x1xf32> to vector<8x32xf32>
    %53 = arith.mulf %49, %52 : vector<8x32xf32>
    %c0_40 = arith.constant 0 : index
    %c0_41 = arith.constant 0 : index
    %c0_42 = arith.constant 0 : index
    %54 = vector.load %arg8[%c0_40, %c0_41, %c0_42] : memref<1x8x32xf32, #tpu.memory_space<vmem>>, vector<1x8x32xf32>
    %55 = vector.shape_cast %54 : vector<1x8x32xf32> to vector<8x32xf32>
    %56 = vector.shape_cast %53 : vector<8x32xf32> to vector<1x8x32xf32>
    tpu.vector_store %arg8[%c0_40, %c0_41, %c0_42], %56 {strides = array<i32>} : memref<1x8x32xf32, #tpu.memory_space<vmem>>, vector<1x8x32xf32>,
    return
  }
  func.func @transform_0(%arg0: i32) -> (i32, i32, i32) {
    %c0_i32 = arith.constant 0 : i32
    %c0_i32_0 = arith.constant 0 : i32
    %c0_i32_1 = arith.constant 0 : i32
    return %arg0, %c0_i32, %c0_i32_0 : i32, i32, i32
  }
  func.func @transform_1(%arg0: i32) -> (i32, i32, i32) {
    %c0_i32 = arith.constant 0 : i32
    %c0_i32_0 = arith.constant 0 : i32
    %c0_i32_1 = arith.constant 0 : i32
    return %arg0, %c0_i32, %c0_i32_0 : i32, i32, i32
  }
  func.func @transform_2(%arg0: i32) -> (i32, i32, i32) {
    %c0_i32 = arith.constant 0 : i32
    %c0_i32_0 = arith.constant 0 : i32
    %c0_i32_1 = arith.constant 0 : i32
    return %arg0, %c0_i32, %c0_i32_0 : i32, i32, i32
  }
  func.func @transform_3(%arg0: i32) -> (i32, i32, i32) {
    %c0_i32 = arith.constant 0 : i32
    %c0_i32_0 = arith.constant 0 : i32
    %c0_i32_1 = arith.constant 0 : i32
    %c0_i32_2 = arith.constant 0 : i32
    return %c0_i32, %c0_i32_0, %c0_i32_1 : i32, i32, i32
  }
  func.func @transform_4(%arg0: i32) -> (i32, i32) {
    %c0_i32 = arith.constant 0 : i32
    %c0_i32_0 = arith.constant 0 : i32
    %c0_i32_1 = arith.constant 0 : i32
    return %c0_i32, %c0_i32_0 : i32, i32
  }
  func.func @transform_5(%arg0: i32) -> (i32, i32) {
    %c0_i32 = arith.constant 0 : i32
    %c0_i32_0 = arith.constant 0 : i32
    %c0_i32_1 = arith.constant 0 : i32
    return %c0_i32, %c0_i32_0 : i32, i32
  }
  func.func @transform_6(%arg0: i32) -> (i32, i32) {
    %c0_i32 = arith.constant 0 : i32
    %c0_i32_0 = arith.constant 0 : i32
    %c0_i32_1 = arith.constant 0 : i32
    return %c0_i32, %c0_i32_0 : i32, i32
  }
  func.func @transform_7(%arg0: i32) -> (i32, i32, i32) {
    %c0_i32 = arith.constant 0 : i32
    %c0_i32_0 = arith.constant 0 : i32
    %c0_i32_1 = arith.constant 0 : i32
    return %arg0, %c0_i32, %c0_i32_0 : i32, i32, i32
  }
}

</mosaic_0001>

<llo_original>
// kernel: tpu_custom_call.1
$region0: #{tpu_custom_call.1}
  #allocation0 [shape = 'u32[]', space=smem, size = 0x4, offset = 0x4, fixed_abs, tag = 'smem constant byte address 0x4 - core index']
  #allocation1 [shape = 'u32[144,128]{1,0:T(1,128)}', space=vmem, size = 0x12000, scoped, tag = 'internal scratch']
  #allocation2 [shape = 'f32[8,32]{1,0:T(8,128)}', space=vmem, size = 0x1000, scoped, tag = 'scratch operand']
  %s0 = inlined_call_operand.vmem [shape: f32[2,8,32], index: 0, kind: input, shape index: {}]
  %s1 = inlined_call_operand.hbm [shape: f32[2,8,32], index: 1, kind: input, shape index: {}]
  %s2 = inlined_call_operand.vmem [shape: f32[2,8,1], index: 2, kind: input, shape index: {}]
  %s3 = inlined_call_operand.hbm [shape: f32[3,32,32], index: 3, kind: input, shape index: {}]
  %s4 = inlined_call_operand.vmem [shape: f32[1,32], index: 4, kind: input, shape index: {}]
  %s5 = inlined_call_operand.vmem [shape: f32[1,32], index: 5, kind: input, shape index: {}]
  %s6 = inlined_call_operand.vmem [shape: f32[1,32], index: 6, kind: input, shape index: {}]
  %s7 = inlined_call_operand.hbm [shape: f32[2,8,32], index: 7, kind: output, shape index: {}]
  %s8 = sld [smem:[#allocation0]]
  $region69: #{tpu_custom_call.1} parent=0
    _
  %s10 = ssub.s32 1, %s8
  %s11 = scalar_select 0, %s10, %s8
  $region1: #{tpu_custom_call.1} parent=0
    #allocation3 [shape = 'u8[8192]{0}', space=vmem, size = 0x2000, scoped, tag = 'input window, operand 1']
    #allocation4 [shape = 's32[2]{0}', space=sflag, size = 0x8, scoped, tag = 'scoped memory for tpu_custom_call.1']
    #allocation5 [shape = 's32[2]{0}', space=sflag, size = 0x8, scoped, tag = 'scoped memory for tpu_custom_call.1']
    #allocation6 [shape = 'u8[49152]{0}', space=vmem, size = 0xc000, scoped, tag = 'input window, operand 3, single buffered']
    #allocation7 [shape = 's32[1]{0}', space=sflag, size = 0x4, scoped, tag = 'scoped memory for tpu_custom_call.1']
    #allocation8 [shape = 'u8[8192]{0}', space=vmem, size = 0x2000, scoped, tag = 'output window, operand 0']
    %12 = vsyncpa [#allocation4], 0
    %s13 = scalar_lea.sflag [#allocation4], 1
    %14 = vsyncpa %s13, 0
    %15 = vsyncpa [#allocation7], 0
    %16 = vsyncpa [#allocation5], 0
    %s17 = scalar_lea.sflag [#allocation5], 1
    %18 = vsyncpa %s17, 0
    loop: start=0, step=1, limit=4
    $region2: #{tpu_custom_call.1} parent=1 // loop_pre_header
      _
    $region3: #{tpu_custom_call.1} parent=1 // loop_header
      %s20 = sphi 0, %s24
      %p21 = scmp.ge.s32.totalorder %s20, 4
      %s30 = sphi 0, %s32
      %s33 = sphi 0, %s30
      %s34 = sphi 0, %s33
      %s50 = sphi 0, %s34
      %s56 = sphi 0, %s58
      %s59 = sphi 0, %s56
      %s60 = sphi 0, %s59
      %s76 = sphi 0, %s60
      %s82 = sphi 0, %s84
      %s85 = sphi 0, %s82
      %s86 = sphi 0, %s85
      %s102 = sphi 0, %s86
      %s106 = sphi 0, %s106
      %s108 = sphi 0, %s106
      %s109 = sphi 0, %s108
      %s123 = sphi 0, %s109
      %s127 = sphi 0, %s127
      %s129 = sphi 0, %s127
      %s130 = sphi 0, %s129
      %s144 = sphi 0, %s130
      %s148 = sphi 0, %s148
      %s150 = sphi 0, %s148
      %s151 = sphi 0, %s150
      %s165 = sphi 0, %s151
      %s169 = sphi 0, %s169
      %s171 = sphi 0, %s169
      %s172 = sphi 0, %s171
      %s186 = sphi 0, %s172
      %s192 = sphi 0, %s194
      %s195 = sphi 0, %s192
      %s196 = sphi 0, %s195
      %s212 = sphi 0, %s196
    $region4: #{tpu_custom_call.1} parent=1 // loop_header_branch
      %23 = sbr.rel (%p21) target = $region8
    $region5: #{tpu_custom_call.1} parent=1 // loop_body
      %s25 = ssub.s32 %s20, 1
      %s26 = ssub.s32 %s20, 2
      %s27 = sadd.s32 %s20, 1
      %s28 = ssub.s32 %s20, %s27
      %p29 = scmp.eq.s32.totalorder %s28, 0
      %s31 = sadd.s32 %s30, 1
      %s32 = scalar_select %p29, %s30, %s31
      %p35 = pneg %p29
      %p36 = scmp.eq.s32.totalorder %s20, 1
      %p37 = por %p35, %p36
      %p38 = scmp.ne.s32.totalorder %s30, %s33
      %p39 = scmp.eq.s32.totalorder %s20, 0
      %p40 = por %p38, %p39
      %p41 = scmp.ne.s32.totalorder %s30, %s33
      %p42 = scmp.eq.s32.totalorder %s25, 1
      %p43 = por %p41, %p42
      %p44 = scmp.ne.s32.totalorder %s33, %s34
      %p45 = scmp.eq.s32.totalorder %s25, 0
      %p46 = por %p44, %p45
      %p47 = scmp.ne.s32.totalorder %s33, %s34
      %p48 = scmp.eq.s32.totalorder %s26, 1
      %p49 = por %p47, %p48
      %p51 = scmp.ne.s32.totalorder %s34, %s50
      %p52 = scmp.eq.s32.totalorder %s26, 0
      %p53 = por %p51, %p52
      %s54 = ssub.s32 %s20, %s27
      %p55 = scmp.eq.s32.totalorder %s54, 0
      %s57 = sadd.s32 %s56, 1
      %s58 = scalar_select %p55, %s56, %s57
      %p61 = pneg %p55
      %p62 = scmp.eq.s32.totalorder %s20, 1
      %p63 = por %p61, %p62
      %p64 = scmp.ne.s32.totalorder %s56, %s59
      %p65 = scmp.eq.s32.totalorder %s20, 0
      %p66 = por %p64, %p65
      %p67 = scmp.ne.s32.totalorder %s56, %s59
      %p68 = scmp.eq.s32.totalorder %s25, 1
      %p69 = por %p67, %p68
      %p70 = scmp.ne.s32.totalorder %s59, %s60
      %p71 = scmp.eq.s32.totalorder %s25, 0
      %p72 = por %p70, %p71
      %p73 = scmp.ne.s32.totalorder %s59, %s60
      %p74 = scmp.eq.s32.totalorder %s26, 1
      %p75 = por %p73, %p74
      %p77 = scmp.ne.s32.totalorder %s60, %s76
      %p78 = scmp.eq.s32.totalorder %s26, 0
      %p79 = por %p77, %p78
      %s80 = ssub.s32 %s20, %s27
      %p81 = scmp.eq.s32.totalorder %s80, 0
      %s83 = sadd.s32 %s82, 1
      %s84 = scalar_select %p81, %s82, %s83
      %p87 = pneg %p81
      %p88 = scmp.eq.s32.totalorder %s20, 1
      %p89 = por %p87, %p88
      %p90 = scmp.ne.s32.totalorder %s82, %s85
      %p91 = scmp.eq.s32.totalorder %s20, 0
      %p92 = por %p90, %p91
      %p93 = scmp.ne.s32.totalorder %s82, %s85
      %p94 = scmp.eq.s32.totalorder %s25, 1
      %p95 = por %p93, %p94
      %p96 = scmp.ne.s32.totalorder %s85, %s86
      %p97 = scmp.eq.s32.totalorder %s25, 0
      %p98 = por %p96, %p97
      %p99 = scmp.ne.s32.totalorder %s85, %s86
      %p100 = scmp.eq.s32.totalorder %s26, 1
      %p101 = por %p99, %p100
      %p103 = scmp.ne.s32.totalorder %s86, %s102
      %p104 = scmp.eq.s32.totalorder %s26, 0
      %p105 = por %p103, %p104
      %s107 = sadd.s32 %s106, 1
      %p110 = scmp.eq.s32.totalorder %s20, 1
      %p111 = scmp.ne.s32.totalorder %s106, %s108
      %p112 = scmp.eq.s32.totalorder %s20, 0
      %p113 = por %p111, %p112
      %p114 = scmp.ne.s32.totalorder %s106, %s108
      %p115 = scmp.eq.s32.totalorder %s25, 1
      %p116 = por %p114, %p115
      %p117 = scmp.ne.s32.totalorder %s108, %s109
      %p118 = scmp.eq.s32.totalorder %s25, 0
      %p119 = por %p117, %p118
      %p120 = scmp.ne.s32.totalorder %s108, %s109
      %p121 = scmp.eq.s32.totalorder %s26, 1
      %p122 = por %p120, %p121
      %p124 = scmp.ne.s32.totalorder %s109, %s123
      %p125 = scmp.eq.s32.totalorder %s26, 0
      %p126 = por %p124, %p125
      %s128 = sadd.s32 %s127, 1
      %p131 = scmp.eq.s32.totalorder %s20, 1
      %p132 = scmp.ne.s32.totalorder %s127, %s129
      %p133 = scmp.eq.s32.totalorder %s20, 0
      %p134 = por %p132, %p133
      %p135 = scmp.ne.s32.totalorder %s127, %s129
      %p136 = scmp.eq.s32.totalorder %s25, 1
      %p137 = por %p135, %p136
      %p138 = scmp.ne.s32.totalorder %s129, %s130
      %p139 = scmp.eq.s32.totalorder %s25, 0
      %p140 = por %p138, %p139
      %p141 = scmp.ne.s32.totalorder %s129, %s130
      %p142 = scmp.eq.s32.totalorder %s26, 1
      %p143 = por %p141, %p142
      %p145 = scmp.ne.s32.totalorder %s130, %s144
      %p146 = scmp.eq.s32.totalorder %s26, 0
      %p147 = por %p145, %p146
      %s149 = sadd.s32 %s148, 1
      %p152 = scmp.eq.s32.totalorder %s20, 1
      %p153 = scmp.ne.s32.totalorder %s148, %s150
      %p154 = scmp.eq.s32.totalorder %s20, 0
      %p155 = por %p153, %p154
      %p156 = scmp.ne.s32.totalorder %s148, %s150
      %p157 = scmp.eq.s32.totalorder %s25, 1
      %p158 = por %p156, %p157
      %p159 = scmp.ne.s32.totalorder %s150, %s151
      %p160 = scmp.eq.s32.totalorder %s25, 0
      %p161 = por %p159, %p160
      %p162 = scmp.ne.s32.totalorder %s150, %s151
      %p163 = scmp.eq.s32.totalorder %s26, 1
      %p164 = por %p162, %p163
      %p166 = scmp.ne.s32.totalorder %s151, %s165
      %p167 = scmp.eq.s32.totalorder %s26, 0
      %p168 = por %p166, %p167
      %s170 = sadd.s32 %s169, 1
      %p173 = scmp.eq.s32.totalorder %s20, 1
      %p174 = scmp.ne.s32.totalorder %s169, %s171
      %p175 = scmp.eq.s32.totalorder %s20, 0
      %p176 = por %p174, %p175
      %p177 = scmp.ne.s32.totalorder %s169, %s171
      %p178 = scmp.eq.s32.totalorder %s25, 1
      %p179 = por %p177, %p178
      %p180 = scmp.ne.s32.totalorder %s171, %s172
      %p181 = scmp.eq.s32.totalorder %s25, 0
      %p182 = por %p180, %p181
      %p183 = scmp.ne.s32.totalorder %s171, %s172
      %p184 = scmp.eq.s32.totalorder %s26, 1
      %p185 = por %p183, %p184
      %p187 = scmp.ne.s32.totalorder %s172, %s186
      %p188 = scmp.eq.s32.totalorder %s26, 0
      %p189 = por %p187, %p188
      %s190 = ssub.s32 %s20, %s27
      %p191 = scmp.eq.s32.totalorder %s190, 0
      %s193 = sadd.s32 %s192, 1
      %s194 = scalar_select %p191, %s192, %s193
      %p197 = pneg %p191
      %p198 = scmp.eq.s32.totalorder %s20, 1
      %p199 = por %p197, %p198
      %p200 = scmp.ne.s32.totalorder %s192, %s195
      %p201 = scmp.eq.s32.totalorder %s20, 0
      %p202 = por %p200, %p201
      %p203 = scmp.ne.s32.totalorder %s192, %s195
      %p204 = scmp.eq.s32.totalorder %s25, 1
      %p205 = por %p203, %p204
      %p206 = scmp.ne.s32.totalorder %s195, %s196
      %p207 = scmp.eq.s32.totalorder %s25, 0
      %p208 = por %p206, %p207
      %p209 = scmp.ne.s32.totalorder %s195, %s196
      %p210 = scmp.eq.s32.totalorder %s26, 1
      %p211 = por %p209, %p210
      %p213 = scmp.ne.s32.totalorder %s196, %s212
      %p214 = scmp.eq.s32.totalorder %s26, 0
      %p215 = por %p213, %p214
      %p216 = scmp.le.s32.totalorder 1, %s20
      %p217 = scmp.lt.s32.totalorder %s20, 3
      %p218 = pnand %p216, %p217
      %p219 = pneg %p218
      // Predicated region
      $region9: #{tpu_custom_call.1} parent=5 // pred_check
        _
      $region10: #{tpu_custom_call.1} parent=5 // pred_check_branch
        %221 = sbr.rel (%p218) target = $region12
      $region11: #{tpu_custom_call.1} parent=5 // pred_region
        %s222 = ssub.s32 %s20, 1
        // Predicated region
        $region13: #{tpu_custom_call.1} parent=11 // pred_check
          %p223 = pneg %p119
        $region14: #{tpu_custom_call.1} parent=11 // pred_check_branch
          %225 = sbr.rel (%p223) target = $region16
        $region15: #{tpu_custom_call.1} parent=11 // pred_region
          %s227 = ssub.s32 1536, 1536
          %228 = vsyncadd [#allocation7], %s227
          %s229 = sshll.u32 [#allocation6], 4
          %s230 = int_to_ptr.vmem [resolvable:$true] %s229
          %235 = dma.hbm_to_vmem [thread:$0]  %s3, 1536, %s230, [#allocation7], 128, 128, 8
        $region16: #{tpu_custom_call.1} parent=11 // pred_fallthru
          _
        // Predicated region
        $region17: #{tpu_custom_call.1} parent=11 // pred_check
          %p236 = pneg %p140
        $region18: #{tpu_custom_call.1} parent=11 // pred_check_branch
          %238 = sbr.rel (%p236) target = $region20
        $region19: #{tpu_custom_call.1} parent=11 // pred_region
          _
        $region20: #{tpu_custom_call.1} parent=11 // pred_fallthru
          _
        // Predicated region
        $region21: #{tpu_custom_call.1} parent=11 // pred_check
          %p239 = pneg %p161
        $region22: #{tpu_custom_call.1} parent=11 // pred_check_branch
          %241 = sbr.rel (%p239) target = $region24
        $region23: #{tpu_custom_call.1} parent=11 // pred_region
          _
        $region24: #{tpu_custom_call.1} parent=11 // pred_fallthru
          _
        // Predicated region
        $region25: #{tpu_custom_call.1} parent=11 // pred_check
          %p242 = pneg %p182
        $region26: #{tpu_custom_call.1} parent=11 // pred_check_branch
          %244 = sbr.rel (%p242) target = $region28
        $region27: #{tpu_custom_call.1} parent=11 // pred_region
          _
        $region28: #{tpu_custom_call.1} parent=11 // pred_fallthru
          _
      $region12: #{tpu_custom_call.1} parent=5 // pred_fallthru
        _
      %p245 = scmp.lt.s32.totalorder %s20, 2
      // Predicated region
      $region29: #{tpu_custom_call.1} parent=5 // pred_check
        %p246 = pneg %p245
      $region30: #{tpu_custom_call.1} parent=5 // pred_check_branch
        %248 = sbr.rel (%p246) target = $region32
      $region31: #{tpu_custom_call.1} parent=5 // pred_region
        // Predicated region
        $region33: #{tpu_custom_call.1} parent=31 // pred_check
          %p249 = pneg %p40
        $region34: #{tpu_custom_call.1} parent=31 // pred_check_branch
          %251 = sbr.rel (%p249) target = $region36
        $region35: #{tpu_custom_call.1} parent=31 // pred_region
          %p252 = scmp.lt.s32.totalorder %s20, 1
          %s253 = scalar_select %p252, %s20, 1
          %s254 = smul.addr %s253, 8
          %s255 = scalar_lea.vmem %s0, %s254
        $region36: #{tpu_custom_call.1} parent=31 // pred_fallthru
          _
        // Predicated region
        $region37: #{tpu_custom_call.1} parent=31 // pred_check
          %p256 = pneg %p66
        $region38: #{tpu_custom_call.1} parent=31 // pred_check_branch
          %258 = sbr.rel (%p256) target = $region40
        $region39: #{tpu_custom_call.1} parent=31 // pred_region
          %s259 = sand.u32 %s56, 1
          %s260 = scalar_lea.sflag [#allocation4], %s259
          %s261 = sand.u32 %s56, 1
          %s262 = smul.addr %s261, 8
          %s263 = scalar_lea.vmem [#allocation3], %s262
          %s265 = ssub.s32 128, 128
          %266 = vsyncadd %s260, %s265
          %s267 = smul.addr %s20, 128
          %s268 = scalar_lea.hbm %s1, %s267
          %s270 = sshll.u32 %s263, 4
          %s271 = int_to_ptr.vmem [resolvable:$true] %s270
          %273 = dma.hbm_to_vmem [thread:$0]  %s268, 128, %s271, %s260
        $region40: #{tpu_custom_call.1} parent=31 // pred_fallthru
          _
        // Predicated region
        $region41: #{tpu_custom_call.1} parent=31 // pred_check
          %p274 = pneg %p92
        $region42: #{tpu_custom_call.1} parent=31 // pred_check_branch
          %276 = sbr.rel (%p274) target = $region44
        $region43: #{tpu_custom_call.1} parent=31 // pred_region
          %p277 = scmp.lt.s32.totalorder %s20, 1
          %s278 = scalar_select %p277, %s20, 1
          %s279 = smul.addr %s278, 8
          %s280 = scalar_lea.vmem %s2, %s279
        $region44: #{tpu_custom_call.1} parent=31 // pred_fallthru
          _
      $region32: #{tpu_custom_call.1} parent=5 // pred_fallthru
        _
      %p281 = scmp.le.s32.totalorder 1, %s20
      %p282 = scmp.lt.s32.totalorder %s20, 3
      %p283 = pnand %p281, %p282
      %p284 = pneg %p283
      // Predicated region
      $region45: #{tpu_custom_call.1} parent=5 // pred_check
        _
      $region46: #{tpu_custom_call.1} parent=5 // pred_check_branch
        %286 = sbr.rel (%p283) target = $region48
      $region47: #{tpu_custom_call.1} parent=5 // pred_region
        %s287 = ssub.s32 %s20, 1
        %s288 = sand.u32 %s59, 1
        %s289 = scalar_lea.sflag [#allocation4], %s288
        %s290 = sand.u32 %s59, 1
        %s291 = smul.addr %s290, 8
        %s292 = scalar_lea.vmem [#allocation3], %s291
        // Predicated region
        $region49: #{tpu_custom_call.1} parent=47 // pred_check
          %p293 = pneg %p72
        $region50: #{tpu_custom_call.1} parent=47 // pred_check_branch
          %295 = sbr.rel (%p293) target = $region52
        $region51: #{tpu_custom_call.1} parent=47 // pred_region
          %296 = dma.done %s289, 128
        $region52: #{tpu_custom_call.1} parent=47 // pred_fallthru
          _
        // Predicated region
        $region53: #{tpu_custom_call.1} parent=47 // pred_check
          %p297 = pneg %p119
        $region54: #{tpu_custom_call.1} parent=47 // pred_check_branch
          %299 = sbr.rel (%p297) target = $region56
        $region55: #{tpu_custom_call.1} parent=47 // pred_region
          %300 = dma.done [#allocation7], 1536
        $region56: #{tpu_custom_call.1} parent=47 // pred_fallthru
          _
        %p301 = scmp.lt.s32.totalorder %s25, 1
        %s302 = scalar_select %p301, %s25, 1
        %s303 = smul.addr %s302, 8
        %s304 = scalar_lea.vmem %s0, %s303
        %p305 = pneg %p46
        %p306 = pneg %p43
        %s307 = sand.u32 %s59, 1
        %s308 = scalar_lea.sflag [#allocation4], %s307
        %s309 = sand.u32 %s59, 1
        %s310 = smul.addr %s309, 8
        %s311 = scalar_lea.vmem [#allocation3], %s310
        %p312 = pneg %p72
        %p313 = pneg %p69
        %p314 = scmp.lt.s32.totalorder %s25, 1
        %s315 = scalar_select %p314, %s25, 1
        %s316 = smul.addr %s315, 8
        %s317 = scalar_lea.vmem %s2, %s316
        %p318 = pneg %p98
        %p319 = pneg %p95
        %p320 = pneg %p119
        %p321 = pneg %p116
        %p322 = pneg %p140
        %p323 = pneg %p137
        %p324 = pneg %p161
        %p325 = pneg %p158
        %p326 = pneg %p182
        %p327 = pneg %p179
        %p328 = pneg %p208
        %p329 = pneg %p205
        %s330 = sand.u32 %s195, 1
        %s331 = scalar_lea.sflag [#allocation5], %s330
        %s332 = sand.u32 %s195, 1
        %s333 = smul.addr %s332, 8
        %s334 = scalar_lea.vmem [#allocation8], %s333
        %p335 = scmp.lt.s32.totalorder %s25, 1
        %s336 = scalar_select %p335, %s25, 1
        %s337 = smul.addr %s336, 8
        %s338 = scalar_lea.vmem %s0, %s337
        %p339 = scmp.lt.s32.totalorder %s25, 1
        %s340 = scalar_select %p339, %s25, 1
        %s341 = smul.addr %s340, 8
        %s342 = scalar_lea.vmem %s2, %s341
        %v343 = vld [vmem:[%s338] sm:$0xff]
        %s344 = scalar_lea.vmem [#allocation6], 32
        %v345 = vld [vmem:[%s344] sm:$0xff]
        %v346 = vld [vmem:[%s344 + $0x8] sm:$0xff]
        %v347 = vld [vmem:[%s344 + $0x10] sm:$0xff]
        %v348 = vld [vmem:[%s344 + $0x18] sm:$0xff]
        %vm349 = vcmask 261120
        %v351 = vsel %vm349, %v343, 0
        %353 = vmatprep.subr.mxu0 0.0
        %354 = vmatpush1.msra.mxu0 0.0
        %355 = vmatprep.subr.mxu0 0.0
        %356 = vmatpush1.msra.mxu0 0.0
        %357 = vmatprep.subr.mxu0 0.0
        %358 = vmatpush1.msra.mxu0 0.0
        %359 = vmatprep.subr.mxu0 0.0
        %360 = vmatpush1.msra.mxu0 0.0
        %361 = vmatprep.subr.mxu0 0.0
        %362 = vmatpush1.msra.mxu0 0.0
        %363 = vmatprep.subr.mxu0 0.0
        %364 = vmatpush1.msra.mxu0 0.0
        %365 = vmatprep.subr.mxu0 0.0
        %366 = vmatpush1.msra.mxu0 0.0
        %367 = vmatprep.subr.mxu0 0.0
        %368 = vmatpush1.msra.mxu0 0.0
        %369 = vmatprep.subr.mxu0 0.0
        %370 = vmatpush1.msra.mxu0 0.0
        %371 = vmatprep.subr.mxu0 0.0
        %372 = vmatpush1.msra.mxu0 0.0
        %373 = vmatprep.subr.mxu0 0.0
        %374 = vmatpush1.msra.mxu0 0.0
        %375 = vmatprep.subr.mxu0 0.0
        %376 = vmatpush1.msra.mxu0 0.0
        %377 = vmatprep.subr.mxu0 0.0
        %378 = vmatpush1.msra.mxu0 %v348
        %379 = vmatprep.subr.mxu0 0.0
        %380 = vmatpush1.msra.mxu0 %v347
        %381 = vmatprep.subr.mxu0 0.0
        %382 = vmatpush1.msra.mxu0 %v346
        %383 = vmatprep.subr.mxu0 0.0
        %384 = vmatpush1.msra.mxu0 %v345
        %385 = vmatprep.subr.mxu0 0.0
        %386 = vmatpush2.msra.mxu0 0.0
        %387 = vmatprep.subr.mxu0 0.0
        %388 = vmatpush2.msra.mxu0 0.0
        %389 = vmatprep.subr.mxu0 0.0
        %390 = vmatpush2.msra.mxu0 0.0
        %391 = vmatprep.subr.mxu0 0.0
        %392 = vmatpush2.msra.mxu0 0.0
        %393 = vmatprep.subr.mxu0 0.0
        %394 = vmatpush2.msra.mxu0 0.0
        %395 = vmatprep.subr.mxu0 0.0
        %396 = vmatpush2.msra.mxu0 0.0
        %397 = vmatprep.subr.mxu0 0.0
        %398 = vmatpush2.msra.mxu0 0.0
        %399 = vmatprep.subr.mxu0 0.0
        %400 = vmatpush2.msra.mxu0 0.0
        %401 = vmatprep.subr.mxu0 0.0
        %402 = vmatpush2.msra.mxu0 0.0
        %403 = vmatprep.subr.mxu0 0.0
        %404 = vmatpush2.msra.mxu0 0.0
        %405 = vmatprep.subr.mxu0 0.0
        %406 = vmatpush2.msra.mxu0 0.0
        %407 = vmatprep.subr.mxu0 0.0
        %408 = vmatpush2.msra.mxu0 0.0
        %409 = vmatprep.subr.mxu0 0.0
        %410 = vmatpush2.msra.mxu0 0.0
        %411 = vmatprep.subr.mxu0 0.0
        %412 = vmatpush2.msra.mxu0 0.0
        %413 = vmatprep.subr.mxu0 0.0
        %414 = vmatpush2.msra.mxu0 0.0
        %415 = vmatprep.subr.mxu0 0.0
        %416 = vmatpush2.msra.mxu0 0.0
        %417 = vmatprep.mubr.f32.mxu0 0.0
        %418 = vmatmul.mubr.f32.gmra.mxu0 %v351
        %v419 = vpop.f32.mrf.mxu0
        %v420 = vadd.f32 0.0, %v419
        %v421 = vpop.f32.mrf.mxu0
        %422 = vdwg.mxu0
        %423 = vst.msk [vmem:[#allocation2] sm:$0xff] %vm349, %v420
        %v424 = vld [vmem:[#allocation6] sm:$0xff]
        %v425 = vld [vmem:[#allocation6 + $0x8] sm:$0xff]
        %v426 = vld [vmem:[#allocation6 + $0x10] sm:$0xff]
        %v427 = vld [vmem:[#allocation6 + $0x18] sm:$0xff]
        %428 = vmatprep.subr.mxu0 0.0
        %429 = vmatpush1.msra.mxu0 0.0
        %430 = vmatprep.subr.mxu0 0.0
        %431 = vmatpush1.msra.mxu0 0.0
        %432 = vmatprep.subr.mxu0 0.0
        %433 = vmatpush1.msra.mxu0 0.0
        %434 = vmatprep.subr.mxu0 0.0
        %435 = vmatpush1.msra.mxu0 0.0
        %436 = vmatprep.subr.mxu0 0.0
        %437 = vmatpush1.msra.mxu0 0.0
        %438 = vmatprep.subr.mxu0 0.0
        %439 = vmatpush1.msra.mxu0 0.0
        %440 = vmatprep.subr.mxu0 0.0
        %441 = vmatpush1.msra.mxu0 0.0
        %442 = vmatprep.subr.mxu0 0.0
        %443 = vmatpush1.msra.mxu0 0.0
        %444 = vmatprep.subr.mxu0 0.0
        %445 = vmatpush1.msra.mxu0 0.0
        %446 = vmatprep.subr.mxu0 0.0
        %447 = vmatpush1.msra.mxu0 0.0
        %448 = vmatprep.subr.mxu0 0.0
        %449 = vmatpush1.msra.mxu0 0.0
        %450 = vmatprep.subr.mxu0 0.0
        %451 = vmatpush1.msra.mxu0 0.0
        %452 = vmatprep.subr.mxu0 0.0
        %453 = vmatpush1.msra.mxu0 %v427
        %454 = vmatprep.subr.mxu0 0.0
        %455 = vmatpush1.msra.mxu0 %v426
        %456 = vmatprep.subr.mxu0 0.0
        %457 = vmatpush1.msra.mxu0 %v425
        %458 = vmatprep.subr.mxu0 0.0
        %459 = vmatpush1.msra.mxu0 %v424
        %460 = vmatprep.subr.mxu0 0.0
        %461 = vmatpush2.msra.mxu0 0.0
        %462 = vmatprep.subr.mxu0 0.0
        %463 = vmatpush2.msra.mxu0 0.0
        %464 = vmatprep.subr.mxu0 0.0
        %465 = vmatpush2.msra.mxu0 0.0
        %466 = vmatprep.subr.mxu0 0.0
        %467 = vmatpush2.msra.mxu0 0.0
        %468 = vmatprep.subr.mxu0 0.0
        %469 = vmatpush2.msra.mxu0 0.0
        %470 = vmatprep.subr.mxu0 0.0
        %471 = vmatpush2.msra.mxu0 0.0
        %472 = vmatprep.subr.mxu0 0.0
        %473 = vmatpush2.msra.mxu0 0.0
        %474 = vmatprep.subr.mxu0 0.0
        %475 = vmatpush2.msra.mxu0 0.0
        %476 = vmatprep.subr.mxu0 0.0
        %477 = vmatpush2.msra.mxu0 0.0
        %478 = vmatprep.subr.mxu0 0.0
        %479 = vmatpush2.msra.mxu0 0.0
        %480 = vmatprep.subr.mxu0 0.0
        %481 = vmatpush2.msra.mxu0 0.0
        %482 = vmatprep.subr.mxu0 0.0
        %483 = vmatpush2.msra.mxu0 0.0
        %484 = vmatprep.subr.mxu0 0.0
        %485 = vmatpush2.msra.mxu0 0.0
        %486 = vmatprep.subr.mxu0 0.0
        %487 = vmatpush2.msra.mxu0 0.0
        %488 = vmatprep.subr.mxu0 0.0
        %489 = vmatpush2.msra.mxu0 0.0
        %490 = vmatprep.subr.mxu0 0.0
        %491 = vmatpush2.msra.mxu0 0.0
        %492 = vmatprep.mubr.f32.mxu0 0.0
        %493 = vmatmul.mubr.f32.gmra.mxu0 %v351
        %v494 = vpop.f32.mrf.mxu0
        %v495 = vadd.f32 0.0, %v494
        %v496 = vpop.f32.mrf.mxu0
        %497 = vdwg.mxu0
        %v498 = vld [vmem:[#allocation2 + $0x1] sm:$0x7f]
        %v499 = vadd.f32 %v498, %v495
        %vm500 = vcmask 260096
        %501 = vst.msk [vmem:[#allocation2 + $0x1] sm:$0x7f] %vm500, %v499
        %s502 = scalar_lea.vmem [#allocation6], 64
        %v503 = vld [vmem:[%s502] sm:$0xff]
        %v504 = vld [vmem:[%s502 + $0x8] sm:$0xff]
        %v505 = vld [vmem:[%s502 + $0x10] sm:$0xff]
        %v506 = vld [vmem:[%s502 + $0x18] sm:$0xff]
        %507 = vmatprep.subr.mxu0 0.0
        %508 = vmatpush1.msra.mxu0 0.0
        %509 = vmatprep.subr.mxu0 0.0
        %510 = vmatpush1.msra.mxu0 0.0
        %511 = vmatprep.subr.mxu0 0.0
        %512 = vmatpush1.msra.mxu0 0.0
        %513 = vmatprep.subr.mxu0 0.0
        %514 = vmatpush1.msra.mxu0 0.0
        %515 = vmatprep.subr.mxu0 0.0
        %516 = vmatpush1.msra.mxu0 0.0
        %517 = vmatprep.subr.mxu0 0.0
        %518 = vmatpush1.msra.mxu0 0.0
        %519 = vmatprep.subr.mxu0 0.0
        %520 = vmatpush1.msra.mxu0 0.0
        %521 = vmatprep.subr.mxu0 0.0
        %522 = vmatpush1.msra.mxu0 0.0
        %523 = vmatprep.subr.mxu0 0.0
        %524 = vmatpush1.msra.mxu0 0.0
        %525 = vmatprep.subr.mxu0 0.0
        %526 = vmatpush1.msra.mxu0 0.0
        %527 = vmatprep.subr.mxu0 0.0
        %528 = vmatpush1.msra.mxu0 0.0
        %529 = vmatprep.subr.mxu0 0.0
        %530 = vmatpush1.msra.mxu0 0.0
        %531 = vmatprep.subr.mxu0 0.0
        %532 = vmatpush1.msra.mxu0 %v506
        %533 = vmatprep.subr.mxu0 0.0
        %534 = vmatpush1.msra.mxu0 %v505
        %535 = vmatprep.subr.mxu0 0.0
        %536 = vmatpush1.msra.mxu0 %v504
        %537 = vmatprep.subr.mxu0 0.0
        %538 = vmatpush1.msra.mxu0 %v503
        %539 = vmatprep.subr.mxu0 0.0
        %540 = vmatpush2.msra.mxu0 0.0
        %541 = vmatprep.subr.mxu0 0.0
        %542 = vmatpush2.msra.mxu0 0.0
        %543 = vmatprep.subr.mxu0 0.0
        %544 = vmatpush2.msra.mxu0 0.0
        %545 = vmatprep.subr.mxu0 0.0
        %546 = vmatpush2.msra.mxu0 0.0
        %547 = vmatprep.subr.mxu0 0.0
        %548 = vmatpush2.msra.mxu0 0.0
        %549 = vmatprep.subr.mxu0 0.0
        %550 = vmatpush2.msra.mxu0 0.0
        %551 = vmatprep.subr.mxu0 0.0
        %552 = vmatpush2.msra.mxu0 0.0
        %553 = vmatprep.subr.mxu0 0.0
        %554 = vmatpush2.msra.mxu0 0.0
        %555 = vmatprep.subr.mxu0 0.0
        %556 = vmatpush2.msra.mxu0 0.0
        %557 = vmatprep.subr.mxu0 0.0
        %558 = vmatpush2.msra.mxu0 0.0
        %559 = vmatprep.subr.mxu0 0.0
        %560 = vmatpush2.msra.mxu0 0.0
        %561 = vmatprep.subr.mxu0 0.0
        %562 = vmatpush2.msra.mxu0 0.0
        %563 = vmatprep.subr.mxu0 0.0
        %564 = vmatpush2.msra.mxu0 0.0
        %565 = vmatprep.subr.mxu0 0.0
        %566 = vmatpush2.msra.mxu0 0.0
        %567 = vmatprep.subr.mxu0 0.0
        %568 = vmatpush2.msra.mxu0 0.0
        %569 = vmatprep.subr.mxu0 0.0
        %570 = vmatpush2.msra.mxu0 0.0
        %571 = vmatprep.mubr.f32.mxu0 0.0
        %572 = vmatmul.mubr.f32.gmra.mxu0 %v351
        %v573 = vpop.f32.mrf.mxu0
        %v574 = vadd.f32 0.0, %v573
        %v575 = vpop.f32.mrf.mxu0
        %576 = vdwg.mxu0
        %v577 = vld [vmem:[#allocation2] sm:$0x7f]
        %v579 = vrot.slane %v574, 1
        %v581 = vadd.f32 %v577, %v579
        %582 = vst.msk [vmem:[#allocation2] sm:$0x7f] %vm500, %v581
        %v583 = vld [vmem:[#allocation2] sm:$0xff]
        %v584 = vld [vmem:[%s4] sm:$0x1]
        %v586 = vlaneseq
        %v587 = vshrl.u32 %v586, 7
        %v588 = vsub.s32 0, %v587
        %v589 = vrot.slane %v584, %v588
        %v591 = vadd.f32 %v583, %v589
        %v592 = vtanh.pop %v591
        %v593 = vld [vmem:[%s292] sm:$0xff]
        %v594 = vadd.f32 %v593, %v592
        %v595 = vsel %vm349, %v594, 0.0
        %596 = vadd.xlane.f32.xlu0 %v595
        %v597 = vpop.xlane.xlu0 %596
        %v598 = vrcp.pop 32.0
        %v599 = vmul.f32 %v597, %v598
        %v600 = vsub.f32 %v594, %v599
        %v601 = vmul.f32 %v600, %v600
        %v602 = vsel %vm349, %v601, 0.0
        %603 = vadd.xlane.f32.xlu0 %v602
        %v604 = vpop.xlane.xlu0 %603
        %v605 = vmul.f32 %v604, %v598
        %v606 = vadd.f32 %v605, 1e-07
        %v607 = vrsqrt.pop %v606
        %v608 = vmul.f32 %v600, %v607
        %v609 = vld [vmem:[%s5] sm:$0x1]
        %v611 = vlaneseq
        %v612 = vshrl.u32 %v611, 7
        %v613 = vsub.s32 0, %v612
        %v614 = vrot.slane %v609, %v613
        %v616 = vmul.f32 %v608, %v614
        %v617 = vld [vmem:[%s6] sm:$0x1]
        %v619 = vlaneseq
        %v620 = vshrl.u32 %v619, 7
        %v621 = vsub.s32 0, %v620
        %v622 = vrot.slane %v617, %v621
        %v624 = vadd.f32 %v616, %v622
        %v625 = vld [vmem:[%s342] sm:$0xff]
        %627 = vset.pattern.permute.xlu0 0
        %628 = vperm.xlu0 %627, %v625
        %v629 = vpop.permute.xlu0 %628
        %v631 = vmul.f32 %v624, %v629
        %632 = vst.msk [vmem:[%s334] sm:$0xff] %vm349, %v631
        %s633 = sand.u32 %s195, 1
        %s634 = scalar_lea.sflag [#allocation5], %s633
        %s635 = sand.u32 %s195, 1
        %s636 = smul.addr %s635, 8
        %s637 = scalar_lea.vmem [#allocation8], %s636
        // Predicated region
        $region57: #{tpu_custom_call.1} parent=47 // pred_check
          %p638 = pneg %p205
        $region58: #{tpu_custom_call.1} parent=47 // pred_check_branch
          %640 = sbr.rel (%p638) target = $region60
        $region59: #{tpu_custom_call.1} parent=47 // pred_region
          %s642 = ssub.s32 128, 128
          %643 = vsyncadd %s634, %s642
          %s644 = smul.addr %s25, 128
          %s645 = scalar_lea.hbm %s7, %s644
          %s647 = sshll.u32 %s637, 4
          %s648 = int_to_ptr.vmem [resolvable:$true] %s647
          %650 = dma.vmem_to_hbm [thread:$0]  %s648, 128, %s645, %s634
        $region60: #{tpu_custom_call.1} parent=47 // pred_fallthru
          _
      $region48: #{tpu_custom_call.1} parent=5 // pred_fallthru
        _
      %p651 = scmp.le.s32.totalorder 2, %s20
      // Predicated region
      $region61: #{tpu_custom_call.1} parent=5 // pred_check
        %p652 = pneg %p651
      $region62: #{tpu_custom_call.1} parent=5 // pred_check_branch
        %654 = sbr.rel (%p652) target = $region64
      $region63: #{tpu_custom_call.1} parent=5 // pred_region
        %s655 = ssub.s32 %s20, 2
        // Predicated region
        $region65: #{tpu_custom_call.1} parent=63 // pred_check
          %p656 = pneg %p211
        $region66: #{tpu_custom_call.1} parent=63 // pred_check_branch
          %658 = sbr.rel (%p656) target = $region68
        $region67: #{tpu_custom_call.1} parent=63 // pred_region
          %s659 = sand.u32 %s196, 1
          %s660 = scalar_lea.sflag [#allocation5], %s659
          %s661 = sand.u32 %s196, 1
          %s662 = smul.addr %s661, 8
          %s663 = scalar_lea.vmem [#allocation8], %s662
          %664 = dma.done %s660, 128
        $region68: #{tpu_custom_call.1} parent=63 // pred_fallthru
          _
      $region64: #{tpu_custom_call.1} parent=5 // pred_fallthru
        _
    $region6: #{tpu_custom_call.1} parent=1 // loop_footer
      %s24 = sadd.s32 1, %s20
    $region7: #{tpu_custom_call.1} parent=1 // loop_footer_branch
      %19 = sbr.rel target = $region3
    $region8: #{tpu_custom_call.1} parent=1 // loop_exit
      _
    %665 = vsyncpa [#allocation4], 1
    %s666 = scalar_lea.sflag [#allocation4], 1
    %667 = vsyncpa %s666, 1
    %668 = vsyncpa [#allocation7], 1
    %669 = vsyncpa [#allocation5], 1
    %s670 = scalar_lea.sflag [#allocation5], 1
    %671 = vsyncpa %s670, 1

</llo_original>
